<compile_context>
chip_gen: v5e
topology: v5e:2x2
jax: 0.10.0
libtpu: 0.0.40
codegen_flags: <defaults>
</compile_context>

<pallas_src>
import numpy as np
import jax
import jax.numpy as jnp
from jax import lax
from jax.experimental import pallas as pl
from jax.experimental.pallas import tpu as pltpu


def _bilstm_kernel(tmax_ref, len_ref, x_ref, w_ref, out_f_ref, out_b_ref,
                   op_ref, c_ref):
    """One batch tile: fused fwd/bwd masked LSTM recurrence + ReLU (time-major)."""
    T, B, D = x_ref.shape
    G8 = w_ref.shape[1]            # 8 * H (both directions, all 4 gates)
    H = G8 // 8
    H2 = 2 * H
    HS = 2 * D                     # start of hidden-state columns in op_ref

    # op_ref layout: [x_fwd (D) | x_bwd (D) | h_fwd (H) | h_bwd (H)]  (bf16)
    op_ref[...] = jnp.zeros_like(op_ref)        # h starts at 0
    c_ref[...] = jnp.zeros_like(c_ref)          # [c_fwd | c_bwd]  (f32)

    lens = len_ref[...]                                      # (B, 1) int32
    half_col = lax.broadcasted_iota(jnp.int32, (1, H2), 1)
    half_is_fwd = half_col < H                               # state layout [fwd | bwd]
    w = w_ref[...]                                           # (2D+2H, 8H) bf16, hoisted
    zrow = jnp.zeros((B, H), out_f_ref.dtype)

    # Longest sequence in this batch tile (scalar-prefetched) -> skip padded steps.
    tmax = tmax_ref[pl.program_id(0)]

    @pl.loop(0, tmax)
    def _(s):
        t_f = s                    # forward time index
        t_b = tmax - 1 - s         # backward time index

        op_ref[:, 0:D] = x_ref[t_f]          # (B, D) bf16
        op_ref[:, D:2 * D] = x_ref[t_b]

        # One MXU matmul covers both directions and both input + hidden
        # projections (block-diagonal fused weights, interleaved gate columns
        # [i_f,i_b,f_f,f_b,g_f,g_b,o_f,o_b]).
        # TODO(synk): for H >= ~128 split into two per-direction (B, D+H)x(D+H, 4H)
        # matmuls (and interleave them) to avoid zero blocks doubling MXU MACs.
        gates = jnp.dot(op_ref[...], w,
                        preferred_element_type=jnp.float32)  # (B, 8H) f32

        # sigmoid(z) = 0.5 * tanh(0.5 z) + 0.5  -> single EUP op per gate.
        i = 0.5 * jnp.tanh(0.5 * gates[:, 0:H2]) + 0.5
        f = 0.5 * jnp.tanh(0.5 * gates[:, H2:2 * H2]) + 0.5
        g = jnp.tanh(gates[:, 2 * H2:3 * H2])
        o = 0.5 * jnp.tanh(0.5 * gates[:, 3 * H2:4 * H2]) + 0.5

        c_new = f * c_ref[...] + i * g
        h_new = o * jnp.tanh(c_new)

        # Per-direction valid-timestep mask, int32 compare (no float casts).
        t_cols = jnp.where(half_is_fwd, t_f, t_b)            # (1, 2H)
        valid = lens > t_cols                                 # (B, 2H) bool

        c_ref[...] = jnp.where(valid, c_new, c_ref[...])
        h_prev = op_ref[:, HS:HS + H2].astype(jnp.float32)
        h_keep = jnp.where(valid, h_new, h_prev)
        op_ref[:, HS:HS + H2] = h_keep.astype(jnp.bfloat16)   # bf16 operand for next step

        # Masked hidden state + ReLU; full-row, lane-dense stores per direction.
        h_out = jnp.maximum(jnp.where(valid, h_new, 0.0), 0.0)
        out_f_ref[t_f] = h_out[:, 0:H]
        out_b_ref[t_b] = h_out[:, H:H2]

    # Zero only the fully-padded tail rows (t >= tmax).
    @pl.loop(0, T)
    def _(t):
        @pl.when(t >= tmax)
        def _():
            out_f_ref[t] = zrow
            out_b_ref[t] = zrow


def _prep_weights(w_ih_f, w_hh_f, w_ih_b, w_hh_b, dtype=jnp.bfloat16):
    """Fused (2D+2H, 8H) weights: row layout [x_f | x_b | h_f | h_b], block-diagonal
    over direction, interleaved gate columns [i_f,i_b,f_f,f_b,g_f,g_b,o_f,o_b]."""
    H = w_hh_f.shape[1]
    D = w_ih_f.shape[1]
    wif = jnp.transpose(w_ih_f).astype(jnp.float32)   # (D, 4H), cols [i|f|g|o]
    wib = jnp.transpose(w_ih_b).astype(jnp.float32)
    whf = jnp.transpose(w_hh_f).astype(jnp.float32)   # (H, 4H)
    whb = jnp.transpose(w_hh_b).astype(jnp.float32)
    zD = jnp.zeros((D, H), jnp.float32)
    zH = jnp.zeros((H, H), jnp.float32)
    cols = []
    for k in range(4):
        sl = slice(k * H, (k + 1) * H)
        cols.append(jnp.concatenate([wif[:, sl], zD, whf[:, sl], zH], axis=0))  # fwd gate k
        cols.append(jnp.concatenate([zD, wib[:, sl], zH, whb[:, sl]], axis=0))  # bwd gate k
    return jnp.concatenate(cols, axis=1).astype(dtype)       # (2D+2H, 8H)


def _round_up(v, m):
    return ((v + m - 1) // m) * m


def _pick_b_tile(B, T, D, H, budget_bytes):
    """Largest batch tile (multiple of 8) whose resident set fits the VMEM budget,
    split into >= 2 tiles when the batch is big enough (v7x megacore)."""
    H2 = 2 * H
    per_b = (2 * T * D * 2            # x block (bf16, double-buffered)
             + 2 * 2 * T * H * 4      # out_f + out_b blocks (f32, double-buffered)
             + (2 * D + H2) * 2       # operand scratch (bf16)
             + H2 * 4)                # cell state (f32)
    fixed = 2 * (2 * D + H2) * 8 * H * 2 + (2 << 20)   # weights (dbl-buffered) + slack
    cap = max(8, ((budget_bytes - fixed) // max(per_b, 1)) // 8 * 8)
    bt = int(min(128, cap))
    if B <= bt:
        if B >= 16:
            bt = min(bt, _round_up(-(-B // 2), 8))   # >= 2 tiles -> both TCs busy
        else:
            bt = min(bt, _round_up(max(B, 1), 8))
    return int(max(8, bt))


def bilstm_forward(x, x_len, w_ih_f, w_hh_f, w_ih_b, w_hh_b, *, b_tile=None,
                   vmem_budget_bytes=48 * 1024 * 1024):
    """Batch-tiled Pallas BiLSTM forward. pad_maxlen is taken to be x.shape[1]."""
    B, T, D = x.shape
    H = w_hh_f.shape[1]            # w_hh_*: (4H, H)
    H2, G8 = 2 * H, 8 * H
    K = 2 * D + 2 * H

    if b_tile is None:
        b_tile = _pick_b_tile(B, T, D, H, vmem_budget_bytes)
    b_tile = max(8, (b_tile // 8) * 8)
    num_tiles = -(-B // b_tile)
    B_pad = num_tiles * b_tile

    w_fused = _prep_weights(w_ih_f, w_hh_f, w_ih_b, w_hh_b)

    # Time-major, batch-padded, bf16 input (single wrapper relayout).
    # TODO(synk): a ragged-last-tile path via the length mask would avoid padding
    # the batch when B is not a multiple of b_tile.
    x_tm = jnp.zeros((T, B_pad, D), jnp.bfloat16)
    x_tm = x_tm.at[:, :B, :].set(jnp.transpose(x.astype(jnp.bfloat16), (1, 0, 2)))

    lens = jnp.clip(x_len.astype(jnp.int32), 0, T)
    lens_p = jnp.zeros((B_pad, 1), jnp.int32).at[:B, 0].set(lens)
    tile_max = jnp.max(lens_p.reshape(num_tiles, b_tile), axis=1).astype(jnp.int32)

    # Explicit scoped-VMEM limit sized from the actual resident set.
    resident = (2 * T * b_tile * D * 2          # x block (bf16, double-buffered)
                + 2 * 2 * T * b_tile * H * 4    # out_f + out_b blocks (f32)
                + 2 * K * G8 * 2                # fused weights (bf16)
                + 2 * b_tile * 4                # lens
                + b_tile * K * 2                # operand scratch (bf16)
                + b_tile * H2 * 4)              # cell state (f32)
    vmem_limit = int(min(max(int(resident * 1.25) + (4 << 20), 32 << 20), 112 << 20))

    flops = 2 * B_pad * T * K * G8
    transcendentals = 5 * B_pad * T * H2        # 4 gate tanh + 1 cell tanh per step
    bytes_accessed = (2 * T * B_pad * D + 4 * 2 * T * B_pad * H
                      + 2 * K * G8 + 4 * B_pad)

    grid_spec = pltpu.PrefetchScalarGridSpec(
        num_scalar_prefetch=1,
        grid=(num_tiles,),
        in_specs=[
            pl.BlockSpec((b_tile, 1), lambda i, tm: (i, 0)),        # lens
            pl.BlockSpec((T, b_tile, D), lambda i, tm: (0, i, 0)),  # x (time-major, bf16)
            pl.BlockSpec((K, G8), lambda i, tm: (0, 0)),            # fused weights
        ],
        out_specs=[
            pl.BlockSpec((T, b_tile, H), lambda i, tm: (0, i, 0)),  # forward half
            pl.BlockSpec((T, b_tile, H), lambda i, tm: (0, i, 0)),  # backward half
        ],
        scratch_shapes=[
            pltpu.VMEM((b_tile, K), jnp.bfloat16),   # [x_f | x_b | h_f | h_b] operand
            pltpu.VMEM((b_tile, H2), jnp.float32),   # cell state [c_f | c_b]
        ],
    )

    out_f, out_b = pl.pallas_call(
        _bilstm_kernel,
        out_shape=(jax.ShapeDtypeStruct((T, B_pad, H), jnp.float32),
                   jax.ShapeDtypeStruct((T, B_pad, H), jnp.float32)),
        grid_spec=grid_spec,
        compiler_params=pltpu.CompilerParams(
            dimension_semantics=("parallel",),
            vmem_limit_bytes=vmem_limit),
        cost_estimate=pl.CostEstimate(flops=flops,
                                      transcendentals=transcendentals,
                                      bytes_accessed=bytes_accessed),
    )(tile_max, lens_p, x_tm, w_fused)

    out_f = jnp.transpose(out_f[:, :B, :], (1, 0, 2))
    out_b = jnp.transpose(out_b[:, :B, :], (1, 0, 2))
    return jnp.concatenate([out_f, out_b], axis=-1)


def ref_bilstm(x, x_len, w_ih_f, w_hh_f, w_ih_b, w_hh_b):
    """Pure NumPy reference with identical semantics (for correctness check)."""
    x = np.asarray(x, np.float32)
    B, T, D = x.shape
    H = w_hh_f.shape[1]
    out = np.zeros((B, T, 2 * H), np.float32)

    def sigmoid(z):
        return 1.0 / (1.0 + np.exp(-z))

    def run(seq, w_ih, w_hh):
        h = np.zeros(H, np.float32)
        c = np.zeros(H, np.float32)
        hs = []
        for xt in seq:
            gates = w_ih @ xt + w_hh @ h
            i = sigmoid(gates[0:H])
            f = sigmoid(gates[H:2 * H])
            g = np.tanh(gates[2 * H:3 * H])
            o = sigmoid(gates[3 * H:4 * H])
            c = f * c + i * g
            h = o * np.tanh(c)
            hs.append(h.copy())
        return np.stack(hs)

    for b in range(B):
        L = int(x_len[b])
        if L == 0:
            continue
        fwd = run(x[b, :L], np.asarray(w_ih_f), np.asarray(w_hh_f))
        bwd = run(x[b, :L][::-1], np.asarray(w_ih_b), np.asarray(w_hh_b))[::-1]
        out[b, :L, :H] = fwd
        out[b, :L, H:] = bwd
    return np.maximum(out, 0.0)


if __name__ == "__main__":
    key = jax.random.PRNGKey(0)
    B, T, D, out_dim = 2, 8, 16, 32
    H = out_dim // 2

    k1, k2, k3, k4, k5 = jax.random.split(key, 5)
    bound = 1.0 / np.sqrt(H)      # PyTorch LSTM default init: U(-1/sqrt(H), 1/sqrt(H))
    w_ih_f = jax.random.uniform(k1, (4 * H, D), jnp.float32, -bound, bound)
    w_hh_f = jax.random.uniform(k2, (4 * H, H), jnp.float32, -bound, bound)
    w_ih_b = jax.random.uniform(k3, (4 * H, D), jnp.float32, -bound, bound)
    w_hh_b = jax.random.uniform(k4, (4 * H, H), jnp.float32, -bound, bound)

    x = jax.random.normal(k5, (B, T, D), jnp.float32)
    x_len = jnp.array([8, 5], jnp.int32)   # variable-length sequences

    out = bilstm_forward(x, x_len, w_ih_f, w_hh_f, w_ih_b, w_hh_b)
    out = jax.block_until_ready(out)

    ref = ref_bilstm(np.asarray(x), np.asarray(x_len), np.asarray(w_ih_f),
                     np.asarray(w_hh_f), np.asarray(w_ih_b), np.asarray(w_hh_b))
    err = float(np.max(np.abs(np.asarray(out) - ref)))
    # bf16 MXU operands (with f32 accumulation / f32 cell state) -> small drift vs f32 ref.
    assert np.allclose(np.asarray(out), ref, atol=5e-2, rtol=5e-2), f"max err {err}"
    print("KERNEL_OK")
</pallas_src>

<mosaic_0001>
module attributes {stable_mosaic.version = 11 : i64} {
  func.func @_bilstm_kernel(%arg0: i32, %arg1: memref<1xi32, #tpu.memory_space<smem>>, %arg2: memref<8x1xi32, #tpu.memory_space<vmem>>, %arg3: memref<8x8x16xbf16, #tpu.memory_space<vmem>>, %arg4: memref<64x128xbf16, #tpu.memory_space<vmem>>, %arg5: memref<8x8x16xf32, #tpu.memory_space<vmem>>, %arg6: memref<8x8x16xf32, #tpu.memory_space<vmem>>, %arg7: memref<8x64xbf16, #tpu.memory_space<vmem>>, %arg8: memref<8x32xf32, #tpu.memory_space<vmem>>) attributes {dimension_semantics = [#tpu.dimension_semantics<parallel>], iteration_bounds = array<i64: 1>, scalar_prefetch = 1 : i64, scratch_operands = 2 : i64, tpu.core_type = #tpu.core_type<tc>, window_params = [{transform_indices = @transform_0, window_bounds = array<i64: 8, 1>}, {transform_indices = @transform_1, window_bounds = array<i64: 8, 8, 16>}, {pipeline_mode = #tpu.pipeline_mode<synchronous>, transform_indices = @transform_2, window_bounds = array<i64: 64, 128>}, {transform_indices = @transform_3, window_bounds = array<i64: 8, 8, 16>}, {transform_indices = @transform_4, window_bounds = array<i64: 8, 8, 16>}]} {
    %cst = arith.constant 0.000000e+00 : bf16
    %0 = vector.broadcast %cst : bf16 to vector<8x64xbf16>
    %c0 = arith.constant 0 : index
    %c0_0 = arith.constant 0 : index
    %1 = vector.load %arg7[%c0, %c0_0] : memref<8x64xbf16, #tpu.memory_space<vmem>>, vector<8x64xbf16>
    tpu.vector_store %arg7[%c0, %c0_0], %0 {strides = array<i32>} : memref<8x64xbf16, #tpu.memory_space<vmem>>, vector<8x64xbf16>,
    %cst_1 = arith.constant 0.000000e+00 : f32
    %2 = vector.broadcast %cst_1 : f32 to vector<8x32xf32>
    %c0_2 = arith.constant 0 : index
    %c0_3 = arith.constant 0 : index
    %3 = vector.load %arg8[%c0_2, %c0_3] : memref<8x32xf32, #tpu.memory_space<vmem>>, vector<8x32xf32>
    tpu.vector_store %arg8[%c0_2, %c0_3], %2 {strides = array<i32>} : memref<8x32xf32, #tpu.memory_space<vmem>>, vector<8x32xf32>,
    %c0_4 = arith.constant 0 : index
    %c0_5 = arith.constant 0 : index
    %4 = vector.load %arg2[%c0_4, %c0_5] : memref<8x1xi32, #tpu.memory_space<vmem>>, vector<8x1xi32>
    %5 = tpu.iota {dimensions = array<i32: 1>} : vector<1x32xi32>
    %c16_i32 = arith.constant 16 : i32
    %6 = vector.broadcast %c16_i32 : i32 to vector<1x32xi32>
    %7 = arith.cmpi slt, %5, %6 : vector<1x32xi32>
    %c0_6 = arith.constant 0 : index
    %c0_7 = arith.constant 0 : index
    %8 = vector.load %arg4[%c0_6, %c0_7] : memref<64x128xbf16, #tpu.memory_space<vmem>>, vector<64x128xbf16>
    %cst_8 = arith.constant 0.000000e+00 : f32
    %9 = vector.broadcast %cst_8 : f32 to vector<8x16xf32>
    %10 = arith.index_cast %arg0 : i32 to index
    %11 = memref.load %arg1[%10] : memref<1xi32, #tpu.memory_space<smem>>
    %c0_i32 = arith.constant 0 : i32
    %12 = arith.subi %11, %c0_i32 : i32
    %c1_i32 = arith.constant 1 : i32
    %c1_i32_9 = arith.constant 1 : i32
    %13 = arith.subi %c1_i32, %c1_i32_9 : i32
    %14 = arith.addi %12, %13 : i32
    %c1_i32_10 = arith.constant 1 : i32
    %15 = arith.divsi %14, %c1_i32_10 : i32
    %c1_i32_11 = arith.constant 1 : i32
    %c0_i32_12 = arith.constant 0 : i32
    %c0_i32_13 = arith.constant 0 : i32
    %16 = arith.subi %15, %c0_i32_13 : i32
    %17 = arith.addi %c0_i32_13, %16 : i32
    %c1_i32_14 = arith.constant 1 : i32
    scf.for %arg9 = %c0_i32_13 to %17 step %c1_i32_14  : i32 {
      %19 = arith.muli %arg9, %c1_i32_11 : i32
      %20 = arith.addi %c0_i32_12, %19 : i32
      %c1_i32_18 = arith.constant 1 : i32
      %21 = arith.subi %11, %c1_i32_18 : i32
      %22 = arith.subi %21, %20 : i32
      %23 = arith.index_cast %20 : i32 to index
      %c0_19 = arith.constant 0 : index
      %c0_20 = arith.constant 0 : index
      %24 = vector.load %arg3[%23, %c0_19, %c0_20] : memref<8x8x16xbf16, #tpu.memory_space<vmem>>, vector<1x8x16xbf16>
      %25 = vector.shape_cast %24 : vector<1x8x16xbf16> to vector<8x16xbf16>
      %c0_21 = arith.constant 0 : index
      %c0_22 = arith.constant 0 : index
      %26 = vector.load %arg7[%c0_21, %c0_22] : memref<8x64xbf16, #tpu.memory_space<vmem>>, vector<8x16xbf16>
      tpu.vector_store %arg7[%c0_21, %c0_22], %25 {strides = array<i32>} : memref<8x64xbf16, #tpu.memory_space<vmem>>, vector<8x16xbf16>,
      %27 = arith.index_cast %22 : i32 to index
      %c0_23 = arith.constant 0 : index
      %c0_24 = arith.constant 0 : index
      %28 = vector.load %arg3[%27, %c0_23, %c0_24] : memref<8x8x16xbf16, #tpu.memory_space<vmem>>, vector<1x8x16xbf16>
      %29 = vector.shape_cast %28 : vector<1x8x16xbf16> to vector<8x16xbf16>
      %c0_25 = arith.constant 0 : index
      %c16 = arith.constant 16 : index
      %30 = vector.load %arg7[%c0_25, %c16] : memref<8x64xbf16, #tpu.memory_space<vmem>>, vector<8x16xbf16>
      tpu.vector_store %arg7[%c0_25, %c16], %29 {strides = array<i32>} : memref<8x64xbf16, #tpu.memory_space<vmem>>, vector<8x16xbf16>,
      %c0_26 = arith.constant 0 : index
      %c0_27 = arith.constant 0 : index
      %31 = vector.load %arg7[%c0_26, %c0_27] : memref<8x64xbf16, #tpu.memory_space<vmem>>, vector<8x64xbf16>
      %cst_28 = arith.constant dense<0.000000e+00> : vector<8x128xf32>
      %32 = tpu.matmul %31, %8, %cst_28 {dimension_numbers = #tpu.dot_dimension_numbers<[1], [0], [0], [1], [0, 0, 1, 1], [], []>} : vector<8x64xbf16>, vector<64x128xbf16>, vector<8x128xf32> -> vector<8x128xf32>
      %33 = vector.extract_strided_slice %32 {offsets = [0, 0], sizes = [8, 32], strides = [1, 1]} : vector<8x128xf32> to vector<8x32xf32>
      %cst_29 = arith.constant 5.000000e-01 : f32
      %34 = vector.broadcast %cst_29 : f32 to vector<8x32xf32>
      %35 = arith.mulf %34, %33 : vector<8x32xf32>
      %36 = math.tanh %35 : vector<8x32xf32>
      %cst_30 = arith.constant 5.000000e-01 : f32
      %37 = vector.broadcast %cst_30 : f32 to vector<8x32xf32>
      %38 = arith.mulf %37, %36 : vector<8x32xf32>
      %cst_31 = arith.constant 5.000000e-01 : f32
      %39 = vector.broadcast %cst_31 : f32 to vector<8x32xf32>
      %40 = arith.addf %38, %39 : vector<8x32xf32>
      %41 = vector.extract_strided_slice %32 {offsets = [0, 32], sizes = [8, 32], strides = [1, 1]} : vector<8x128xf32> to vector<8x32xf32>
      %cst_32 = arith.constant 5.000000e-01 : f32
      %42 = vector.broadcast %cst_32 : f32 to vector<8x32xf32>
      %43 = arith.mulf %42, %41 : vector<8x32xf32>
      %44 = math.tanh %43 : vector<8x32xf32>
      %cst_33 = arith.constant 5.000000e-01 : f32
      %45 = vector.broadcast %cst_33 : f32 to vector<8x32xf32>
      %46 = arith.mulf %45, %44 : vector<8x32xf32>
      %cst_34 = arith.constant 5.000000e-01 : f32
      %47 = vector.broadcast %cst_34 : f32 to vector<8x32xf32>
      %48 = arith.addf %46, %47 : vector<8x32xf32>
      %49 = vector.extract_strided_slice %32 {offsets = [0, 64], sizes = [8, 32], strides = [1, 1]} : vector<8x128xf32> to vector<8x32xf32>
      %50 = math.tanh %49 : vector<8x32xf32>
      %51 = vector.extract_strided_slice %32 {offsets = [0, 96], sizes = [8, 32], strides = [1, 1]} : vector<8x128xf32> to vector<8x32xf32>
      %cst_35 = arith.constant 5.000000e-01 : f32
      %52 = vector.broadcast %cst_35 : f32 to vector<8x32xf32>
      %53 = arith.mulf %52, %51 : vector<8x32xf32>
      %54 = math.tanh %53 : vector<8x32xf32>
      %cst_36 = arith.constant 5.000000e-01 : f32
      %55 = vector.broadcast %cst_36 : f32 to vector<8x32xf32>
      %56 = arith.mulf %55, %54 : vector<8x32xf32>
      %cst_37 = arith.constant 5.000000e-01 : f32
      %57 = vector.broadcast %cst_37 : f32 to vector<8x32xf32>
      %58 = arith.addf %56, %57 : vector<8x32xf32>
      %c0_38 = arith.constant 0 : index
      %c0_39 = arith.constant 0 : index
      %59 = vector.load %arg8[%c0_38, %c0_39] : memref<8x32xf32, #tpu.memory_space<vmem>>, vector<8x32xf32>
      %60 = arith.mulf %48, %59 : vector<8x32xf32>
      %61 = arith.mulf %40, %50 : vector<8x32xf32>
      %62 = arith.addf %60, %61 : vector<8x32xf32>
      %63 = math.tanh %62 : vector<8x32xf32>
      %64 = arith.mulf %58, %63 : vector<8x32xf32>
      %65 = vector.broadcast %20 : i32 to vector<1x32xi32>
      %66 = vector.broadcast %22 : i32 to vector<1x32xi32>
      %67 = arith.select %7, %65, %66 : vector<1x32xi1>, vector<1x32xi32>
      %68 = vector.broadcast %4 : vector<8x1xi32> to vector<8x32xi32>
      %69 = vector.broadcast %67 : vector<1x32xi32> to vector<8x32xi32>
      %70 = arith.cmpi sgt, %68, %69 : vector<8x32xi32>
      %c0_40 = arith.constant 0 : index
      %c0_41 = arith.constant 0 : index
      %71 = vector.load %arg8[%c0_40, %c0_41] : memref<8x32xf32, #tpu.memory_space<vmem>>, vector<8x32xf32>
      %72 = arith.select %70, %62, %71 : vector<8x32xi1>, vector<8x32xf32>
      %c0_42 = arith.constant 0 : index
      %c0_43 = arith.constant 0 : index
      %73 = vector.load %arg8[%c0_42, %c0_43] : memref<8x32xf32, #tpu.memory_space<vmem>>, vector<8x32xf32>
      tpu.vector_store %arg8[%c0_42, %c0_43], %72 {strides = array<i32>} : memref<8x32xf32, #tpu.memory_space<vmem>>, vector<8x32xf32>,
      %c0_44 = arith.constant 0 : index
      %c32 = arith.constant 32 : index
      %74 = vector.load %arg7[%c0_44, %c32] : memref<8x64xbf16, #tpu.memory_space<vmem>>, vector<8x32xbf16>
      %75 = arith.extf %74 : vector<8x32xbf16> to vector<8x32xf32>
      %76 = arith.select %70, %64, %75 : vector<8x32xi1>, vector<8x32xf32>
      %77 = arith.truncf %76 : vector<8x32xf32> to vector<8x32xbf16>
      %c0_45 = arith.constant 0 : index
      %c32_46 = arith.constant 32 : index
      %78 = vector.load %arg7[%c0_45, %c32_46] : memref<8x64xbf16, #tpu.memory_space<vmem>>, vector<8x32xbf16>
      tpu.vector_store %arg7[%c0_45, %c32_46], %77 {strides = array<i32>} : memref<8x64xbf16, #tpu.memory_space<vmem>>, vector<8x32xbf16>,
      %cst_47 = arith.constant 0.000000e+00 : f32
      %79 = vector.broadcast %cst_47 : f32 to vector<8x32xf32>
      %80 = arith.select %70, %64, %79 : vector<8x32xi1>, vector<8x32xf32>
      %cst_48 = arith.constant 0.000000e+00 : f32
      %81 = vector.broadcast %cst_48 : f32 to vector<8x32xf32>
      %82 = arith.maximumf %80, %81 : vector<8x32xf32>
      %83 = vector.extract_strided_slice %82 {offsets = [0, 0], sizes = [8, 16], strides = [1, 1]} : vector<8x32xf32> to vector<8x16xf32>
      %84 = arith.index_cast %20 : i32 to index
      %c0_49 = arith.constant 0 : index
      %c0_50 = arith.constant 0 : index
      %85 = vector.load %arg5[%84, %c0_49, %c0_50] : memref<8x8x16xf32, #tpu.memory_space<vmem>>, vector<1x8x16xf32>
      %86 = vector.shape_cast %85 : vector<1x8x16xf32> to vector<8x16xf32>
      %87 = vector.shape_cast %83 : vector<8x16xf32> to vector<1x8x16xf32>
      tpu.vector_store %arg5[%84, %c0_49, %c0_50], %87 {strides = array<i32>} : memref<8x8x16xf32, #tpu.memory_space<vmem>>, vector<1x8x16xf32>,
      %88 = vector.extract_strided_slice %82 {offsets = [0, 16], sizes = [8, 16], strides = [1, 1]} : vector<8x32xf32> to vector<8x16xf32>
      %89 = arith.index_cast %22 : i32 to index
      %c0_51 = arith.constant 0 : index
      %c0_52 = arith.constant 0 : index
      %90 = vector.load %arg6[%89, %c0_51, %c0_52] : memref<8x8x16xf32, #tpu.memory_space<vmem>>, vector<1x8x16xf32>
      %91 = vector.shape_cast %90 : vector<1x8x16xf32> to vector<8x16xf32>
      %92 = vector.shape_cast %88 : vector<8x16xf32> to vector<1x8x16xf32>
      tpu.vector_store %arg6[%89, %c0_51, %c0_52], %92 {strides = array<i32>} : memref<8x8x16xf32, #tpu.memory_space<vmem>>, vector<1x8x16xf32>,
    }
    %c0_i32_15 = arith.constant 0 : i32
    %c8_i32 = arith.constant 8 : i32
    %18 = arith.addi %c0_i32_15, %c8_i32 : i32
    %c1_i32_16 = arith.constant 1 : i32
    scf.for %arg9 = %c0_i32_15 to %18 step %c1_i32_16  : i32 {
      %c1_i32_18 = arith.constant 1 : i32
      %19 = arith.muli %arg9, %c1_i32_18 : i32
      %c0_i32_19 = arith.constant 0 : i32
      %20 = arith.addi %c0_i32_19, %19 : i32
      %21 = arith.cmpi sge, %20, %11 : i32
      %22 = arith.extui %21 : i1 to i32
      %c0_i32_20 = arith.constant 0 : i32
      %23 = arith.cmpi ne, %22, %c0_i32_20 : i32
      scf.if %23 {
        %24 = arith.index_cast %20 : i32 to index
        %c0_21 = arith.constant 0 : index
        %c0_22 = arith.constant 0 : index
        %25 = vector.load %arg5[%24, %c0_21, %c0_22] : memref<8x8x16xf32, #tpu.memory_space<vmem>>, vector<1x8x16xf32>
        %26 = vector.shape_cast %25 : vector<1x8x16xf32> to vector<8x16xf32>
        %27 = vector.shape_cast %9 : vector<8x16xf32> to vector<1x8x16xf32>
        tpu.vector_store %arg5[%24, %c0_21, %c0_22], %27 {strides = array<i32>} : memref<8x8x16xf32, #tpu.memory_space<vmem>>, vector<1x8x16xf32>,
        %28 = arith.index_cast %20 : i32 to index
        %c0_23 = arith.constant 0 : index
        %c0_24 = arith.constant 0 : index
        %29 = vector.load %arg6[%28, %c0_23, %c0_24] : memref<8x8x16xf32, #tpu.memory_space<vmem>>, vector<1x8x16xf32>
        %30 = vector.shape_cast %29 : vector<1x8x16xf32> to vector<8x16xf32>
        %31 = vector.shape_cast %9 : vector<8x16xf32> to vector<1x8x16xf32>
        tpu.vector_store %arg6[%28, %c0_23, %c0_24], %31 {strides = array<i32>} : memref<8x8x16xf32, #tpu.memory_space<vmem>>, vector<1x8x16xf32>,
      } else {
      }
    }
    %c8_i32_17 = arith.constant 8 : i32
    return
  }
  func.func @transform_0(%arg0: i32, %arg1: memref<1xi32, #tpu.memory_space<smem>>) -> (i32, i32) {
    %c0_i32 = arith.constant 0 : i32
    %c0_i32_0 = arith.constant 0 : i32
    return %arg0, %c0_i32 : i32, i32
  }
  func.func @transform_1(%arg0: i32, %arg1: memref<1xi32, #tpu.memory_space<smem>>) -> (i32, i32, i32) {
    %c0_i32 = arith.constant 0 : i32
    %c0_i32_0 = arith.constant 0 : i32
    %c0_i32_1 = arith.constant 0 : i32
    return %c0_i32, %arg0, %c0_i32_0 : i32, i32, i32
  }
  func.func @transform_2(%arg0: i32, %arg1: memref<1xi32, #tpu.memory_space<smem>>) -> (i32, i32) {
    %c0_i32 = arith.constant 0 : i32
    %c0_i32_0 = arith.constant 0 : i32
    %c0_i32_1 = arith.constant 0 : i32
    return %c0_i32, %c0_i32_0 : i32, i32
  }
  func.func @transform_3(%arg0: i32, %arg1: memref<1xi32, #tpu.memory_space<smem>>) -> (i32, i32, i32) {
    %c0_i32 = arith.constant 0 : i32
    %c0_i32_0 = arith.constant 0 : i32
    %c0_i32_1 = arith.constant 0 : i32
    return %c0_i32, %arg0, %c0_i32_0 : i32, i32, i32
  }
  func.func @transform_4(%arg0: i32, %arg1: memref<1xi32, #tpu.memory_space<smem>>) -> (i32, i32, i32) {
    %c0_i32 = arith.constant 0 : i32
    %c0_i32_0 = arith.constant 0 : i32
    %c0_i32_1 = arith.constant 0 : i32
    return %c0_i32, %arg0, %c0_i32_0 : i32, i32, i32
  }
}

</mosaic_0001>

<llo_original>
// kernel: tpu_custom_call.1
$region0: #{tpu_custom_call.1}
  #allocation0 [shape = 'u32[]', space=smem, size = 0x4, offset = 0x4, fixed_abs, tag = 'smem constant byte address 0x4 - core index']
  #allocation1 [shape = 'u32[72,128]{1,0:T(1,128)}', space=vmem, size = 0x9000, scoped, tag = 'internal scratch']
  #allocation2 [shape = 'bf16[8,64]{1,0:T(8,128)(2,1)}', space=vmem, size = 0x800, scoped, tag = 'scratch operand']
  #allocation3 [shape = 'f32[8,32]{1,0:T(8,128)}', space=vmem, size = 0x1000, scoped, tag = 'scratch operand']
  #allocation4 [shape = 's32[1]{0}', space=sflag, size = 0x4, scoped, tag = 'scoped memory for tpu_custom_call.1']
  #allocation5 [shape = 's32[1]{0:T(128)S(6)}', space=smem, size = 0x200, scoped, tag = 'prefetched SMEM operand 0']
  %s0 = inlined_call_operand.<no memory space> [shape: s32[1], index: 0, kind: input, shape index: {}]
  %s1 = inlined_call_operand.vmem [shape: s32[8,1], index: 1, kind: input, shape index: {}]
  %s2 = inlined_call_operand.hbm [shape: bf16[8,8,16], index: 2, kind: input, shape index: {}]
  %s3 = inlined_call_operand.hbm [shape: bf16[64,128], index: 3, kind: input, shape index: {}]
  %s4 = inlined_call_operand.hbm [shape: f32[8,8,16], index: 4, kind: output, shape index: {0}]
  %s5 = inlined_call_operand.hbm [shape: f32[8,8,16], index: 5, kind: output, shape index: {1}]
  %6 = xla_tuple %s4, %s5
  %s7 = sld [smem:[#allocation0]]
  $region56: #{tpu_custom_call.1} parent=0
    _
  %s9 = ssub.s32 1, %s7
  %s10 = scalar_select 0, %s9, %s7
  %11 = sst [smem:[#allocation5]] %s0
  $region1: #{tpu_custom_call.1} parent=0
    #allocation6 [shape = 'u8[16384]{0}', space=vmem, size = 0x4000, scoped, tag = 'input window, operand 2, single buffered']
    #allocation7 [shape = 's32[1]{0}', space=sflag, size = 0x4, scoped, tag = 'scoped memory for tpu_custom_call.1']
    #allocation8 [shape = 's32[1]{0}', space=sflag, size = 0x4, scoped, tag = 'scoped memory for tpu_custom_call.1']
    #allocation9 [shape = 'u8[16384]{0}', space=vmem, size = 0x4000, scoped, tag = 'input window, operand 3, single buffered']
    #allocation10 [shape = 's32[1]{0}', space=sflag, size = 0x4, scoped, tag = 'scoped memory for tpu_custom_call.1']
    #allocation11 [shape = 'u8[32768]{0}', space=vmem, size = 0x8000, scoped, tag = 'output window, operand 0, single buffered']
    #allocation12 [shape = 'u8[32768]{0}', space=vmem, size = 0x8000, scoped, tag = 'output window, operand 1, single buffered']
    #allocation13 [shape = 's32[1]{0}', space=sflag, size = 0x4, scoped, tag = 'scoped memory for tpu_custom_call.1']
    %12 = vsyncpa [#allocation7], 0
    %13 = vsyncpa [#allocation10], 0
    %14 = vsyncpa [#allocation8], 0
    %15 = vsyncpa [#allocation13], 0
    // Predicated region
    $region2: #{tpu_custom_call.1} parent=1 // pred_check
      _
    $region3: #{tpu_custom_call.1} parent=1 // pred_check_branch
      %17 = sbr.rel (0) target = $region5
    $region4: #{tpu_custom_call.1} parent=1 // pred_region
      _
    $region5: #{tpu_custom_call.1} parent=1 // pred_fallthru
      _
    // Predicated region
    $region6: #{tpu_custom_call.1} parent=1 // pred_check
      _
    $region7: #{tpu_custom_call.1} parent=1 // pred_check_branch
      %19 = sbr.rel (0) target = $region9
    $region8: #{tpu_custom_call.1} parent=1 // pred_region
      %21 = vsyncadd [#allocation7], 0
      %s22 = sshll.u32 %s2, 4
      %s23 = int_to_ptr.hbm [resolvable:$true] %s22
      %s24 = sshll.u32 [#allocation6], 4
      %s25 = int_to_ptr.vmem [resolvable:$true] %s24
      %30 = dma.hbm_to_vmem [thread:$0]  %s23, 512, %s25, [#allocation7], 64, 64, 4
    $region9: #{tpu_custom_call.1} parent=1 // pred_fallthru
      _
    // Predicated region
    $region10: #{tpu_custom_call.1} parent=1 // pred_check
      _
    $region11: #{tpu_custom_call.1} parent=1 // pred_check_branch
      %32 = sbr.rel (0) target = $region13
    $region12: #{tpu_custom_call.1} parent=1 // pred_region
      %34 = vsyncadd [#allocation10], 0
      %s35 = sshll.u32 %s3, 4
      %s36 = int_to_ptr.hbm [resolvable:$true] %s35
      %s37 = sshll.u32 [#allocation9], 4
      %s38 = int_to_ptr.vmem [resolvable:$true] %s37
      %43 = dma.hbm_to_vmem [thread:$0]  %s36, 512, %s38, [#allocation10], 64, 64, 4
    $region13: #{tpu_custom_call.1} parent=1 // pred_fallthru
      _
    // Predicated region
    $region14: #{tpu_custom_call.1} parent=1 // pred_check
      _
    $region15: #{tpu_custom_call.1} parent=1 // pred_check_branch
      %45 = sbr.rel (0) target = $region17
    $region16: #{tpu_custom_call.1} parent=1 // pred_region
      %47 = dma.done [#allocation7], 512
    $region17: #{tpu_custom_call.1} parent=1 // pred_fallthru
      _
    // Predicated region
    $region18: #{tpu_custom_call.1} parent=1 // pred_check
      _
    $region19: #{tpu_custom_call.1} parent=1 // pred_check_branch
      %49 = sbr.rel (0) target = $region21
    $region20: #{tpu_custom_call.1} parent=1 // pred_region
      %51 = dma.done [#allocation10], 512
    $region21: #{tpu_custom_call.1} parent=1 // pred_fallthru
      _
    %vm53 = vcmask 519168
    %54 = vst.msk [vmem:[#allocation2] sm:$0xf] %vm53, 0
    %vm55 = vcmask 261120
    %56 = vst.msk [vmem:[#allocation3] sm:$0xff] %vm55, 0.0
    %v57 = vld [vmem:[%s1] sm:$0xff]
    %v58 = vlaneseq
    %v59 = vand.u32 %v58, 127
    %vm60 = vcmp.lt.s32.totalorder %v59, 16
    %v61 = vld [vmem:[#allocation9] sm:$0xf]
    %v62 = vld [vmem:[#allocation9 + $0x4] sm:$0xf]
    %v63 = vld [vmem:[#allocation9 + $0x8] sm:$0xf]
    %v64 = vld [vmem:[#allocation9 + $0xc] sm:$0xf]
    %v65 = vld [vmem:[#allocation9 + $0x10] sm:$0xf]
    %v66 = vld [vmem:[#allocation9 + $0x14] sm:$0xf]
    %v67 = vld [vmem:[#allocation9 + $0x18] sm:$0xf]
    %v68 = vld [vmem:[#allocation9 + $0x1c] sm:$0xf]
    %s69 = sld [smem:[#allocation5]]
    // While loop
    $region22: #{tpu_custom_call.1} parent=1 // loop_pre_header
      _
    $region23: #{tpu_custom_call.1} parent=1 // loop_header
      %s71 = sphi 0, %s73
      %p72 = scmp.ge.s32.totalorder %s71, %s69
    $region24: #{tpu_custom_call.1} parent=1 // loop_header_branch
      %75 = sbr.rel (%p72) target = $region28
    $region25: #{tpu_custom_call.1} parent=1 // loop_body
      %s76 = ssub.s32 %s69, 1
      %s77 = ssub.s32 %s76, %s71
      %s78 = smul.addr %s71, 4
      %s79 = scalar_lea.vmem [#allocation6], %s78
      %v80 = vld [vmem:[%s79] sm:$0xf]
      %vm81 = vcmask 125952
      %82 = vst.msk [vmem:[#allocation2] sm:$0xf] %vm81, %v80
      %s83 = smul.addr %s77, 4
      %s84 = scalar_lea.vmem [#allocation6], %s83
      %v85 = vld [vmem:[%s84] sm:$0xf]
      %87 = vrot.lane.b32.xlu0 %v85, 16
      %v88 = vpop.permute.xlu0 %87
      %vm90 = vcmask 257152
      %91 = vst.msk [vmem:[#allocation2] sm:$0xf] %vm90, %v88
      %v92 = vld [vmem:[#allocation2] sm:$0xf]
      %v101 = vunpack.c.l.b16 %v61
      %v102 = vunpack.c.l.b16 %v62
      %v103 = vunpack.c.l.b16 %v63
      %v104 = vunpack.c.l.b16 %v64
      %v105 = vunpack.c.l.b16 %v65
      %v106 = vunpack.c.l.b16 %v66
      %v107 = vunpack.c.l.b16 %v67
      %v108 = vunpack.c.l.b16 %v68
      %v109 = vpack.c.b16 %v102, %v101
      %v110 = vpack.c.b16 %v104, %v103
      %v111 = vpack.c.b16 %v106, %v105
      %v112 = vpack.c.b16 %v108, %v107
      %vm117 = vcmask 523264
      %v119 = vsel %vm117, %v92, 0
      %121 = vmatpush.bf16.msra.mxu0 0
      %122 = vmatpush.bf16.msra.mxu0 0
      %123 = vmatpush.bf16.msra.mxu0 0
      %124 = vmatpush.bf16.msra.mxu0 0
      %125 = vmatpush.bf16.msra.mxu0 %v112
      %126 = vmatpush.bf16.msra.mxu0 %v111
      %127 = vmatpush.bf16.msra.mxu0 %v110
      %128 = vmatpush.bf16.msra.mxu0 %v109
      %129 = vmatmul.bf16.gmra.mxu0 %v119
      %v130 = vpop.f32.mrf.mxu0
      %v131 = vadd.f32 0.0, %v130
      %v132 = vpop.f32.mrf.mxu0
      %133 = vdwg.mxu0
      %v134 = vmul.f32 %v131, 0.5
      %v135 = vtanh.pop %v134
      %v136 = vmul.f32 %v135, 0.5
      %v137 = vadd.f32 %v136, 0.5
      %v138 = vtanh.pop %v131
      %v139 = vld [vmem:[#allocation3] sm:$0xff]
      %141 = vrot.lane.b32.xlu0 %v139, 32
      %v142 = vpop.permute.xlu0 %141
      %v144 = vmul.f32 %v137, %v142
      %146 = vrot.lane.b32.xlu0 %v138, 64
      %v147 = vpop.permute.xlu0 %146
      %v149 = vmul.f32 %v137, %v147
      %151 = vrot.lane.b32.xlu0 %v149, 32
      %v152 = vpop.permute.xlu0 %151
      %v154 = vadd.f32 %v144, %v152
      %v155 = vtanh.pop %v154
      %157 = vrot.lane.b32.xlu0 %v155, 64
      %v158 = vpop.permute.xlu0 %157
      %v160 = vmul.f32 %v137, %v158
      %v161 = vstv %s71
      %v162 = vstv %s77
      %v163 = vsel %vm60, %v161, %v162
      %164 = vset.pattern.permute.xlu0 0
      %165 = vperm.xlu0 %164, %v57
      %v166 = vpop.permute.xlu0 %165
      %vm167 = vcmp.gt.s32.totalorder %v166, %v163
      %169 = vrot.lane.b32.xlu0 %v154, 96
      %v170 = vpop.permute.xlu0 %169
      %v172 = vsel %vm167, %v170, %v139
      %173 = vst.msk [vmem:[#allocation3] sm:$0xff] %vm55, %v172
      %v174 = vld [vmem:[#allocation2] sm:$0xf]
      %v175 = vunpack.c.l.bf16 %v174
      %177 = vrot.lane.b32.xlu0 %v160, 32
      %v178 = vpop.permute.xlu0 %177
      %181 = vrot.lane.b32.xlu0 %v175, 96
      %v182 = vpop.permute.xlu0 %181
      %v184 = vsel %vm167, %v178, %v182
      %v185 = vpack.c.bf16 %v184, %v184
      %187 = vrot.lane.b32.xlu0 %v185, 32
      %v188 = vpop.permute.xlu0 %187
      %vm190 = vcmask 519424
      %191 = vst.msk [vmem:[#allocation2] sm:$0xf] %vm190, %v188
      %v192 = vsel %vm167, %v178, 0.0
      %v193 = vmax.f32 %v192, 0.0
      %s194 = smul.u32 %s71, 8
      %s195 = scalar_lea.vmem [#allocation11], %s194
      %vm196 = vcmask 130048
      %197 = vst.msk [vmem:[%s195] sm:$0xff] %vm196, %v193
      %199 = vrot.lane.b32.xlu0 %v193, 112
      %v200 = vpop.permute.xlu0 %199
      %s202 = smul.u32 %s77, 8
      %s203 = scalar_lea.vmem [#allocation12], %s202
      %204 = vst.msk [vmem:[%s203] sm:$0xff] %vm196, %v200
    $region26: #{tpu_custom_call.1} parent=1 // loop_footer
      %s73 = sadd.s32 %s71, 1
    $region27: #{tpu_custom_call.1} parent=1 // loop_footer_branch
      %70 = sbr.rel target = $region23
    $region28: #{tpu_custom_call.1} parent=1 // loop_exit
      _
    loop: start=0, step=1, limit=8
    $region29: #{tpu_custom_call.1} parent=1 // loop_pre_header
      _
    $region30: #{tpu_custom_call.1} parent=1 // loop_header
      %s206 = sphi 0, %s210
      %p207 = scmp.ge.s32.totalorder %s206, 8
    $region31: #{tpu_custom_call.1} parent=1 // loop_header_branch
      %209 = sbr.rel (%p207) target = $region35
    $region32: #{tpu_custom_call.1} parent=1 // loop_body
      %p211 = scmp.ge.s32.totalorder %s206, %s69
      // Predicated region
      $region36: #{tpu_custom_call.1} parent=32 // pred_check
        %p212 = pneg %p211
      $region37: #{tpu_custom_call.1} parent=32 // pred_check_branch
        %214 = sbr.rel (%p212) target = $region39
      $region38: #{tpu_custom_call.1} parent=32 // pred_region
        %s215 = smul.u32 %s206, 8
        %s216 = scalar_lea.vmem [#allocation11], %s215
        %vm217 = vcmask 130048
        %218 = vst.msk [vmem:[%s216] sm:$0xff] %vm217, 0.0
        %s219 = scalar_lea.vmem [#allocation12], %s215
        %220 = vst.msk [vmem:[%s219] sm:$0xff] %vm217, 0.0
      $region39: #{tpu_custom_call.1} parent=32 // pred_fallthru
        _
    $region33: #{tpu_custom_call.1} parent=1 // loop_footer
      %s210 = sadd.s32 1, %s206
    $region34: #{tpu_custom_call.1} parent=1 // loop_footer_branch
      %205 = sbr.rel target = $region30
    $region35: #{tpu_custom_call.1} parent=1 // loop_exit
      _
    // Predicated region
    $region40: #{tpu_custom_call.1} parent=1 // pred_check
      _
    $region41: #{tpu_custom_call.1} parent=1 // pred_check_branch
      %222 = sbr.rel (0) target = $region43
    $region42: #{tpu_custom_call.1} parent=1 // pred_region
      %224 = vsyncadd [#allocation8], 0
      %s225 = sshll.u32 [#allocation11], 4
      %s226 = int_to_ptr.vmem [resolvable:$true] %s225
      %s227 = sshll.u32 %s4, 4
      %s228 = int_to_ptr.hbm [resolvable:$true] %s227
      %233 = dma.vmem_to_hbm [thread:$0]  %s226, 1024, %s228, [#allocation8], 128, 128, 8
    $region43: #{tpu_custom_call.1} parent=1 // pred_fallthru
      _
    // Predicated region
    $region44: #{tpu_custom_call.1} parent=1 // pred_check
      _
    $region45: #{tpu_custom_call.1} parent=1 // pred_check_branch
      %235 = sbr.rel (0) target = $region47
    $region46: #{tpu_custom_call.1} parent=1 // pred_region
      %237 = vsyncadd [#allocation13], 0
      %s238 = sshll.u32 [#allocation12], 4
      %s239 = int_to_ptr.vmem [resolvable:$true] %s238
      %s240 = sshll.u32 %s5, 4
      %s241 = int_to_ptr.hbm [resolvable:$true] %s240
      %246 = dma.vmem_to_hbm [thread:$0]  %s239, 1024, %s241, [#allocation13], 128, 128, 8
    $region47: #{tpu_custom_call.1} parent=1 // pred_fallthru
      _
    // Predicated region
    $region48: #{tpu_custom_call.1} parent=1 // pred_check
      _
    $region49: #{tpu_custom_call.1} parent=1 // pred_check_branch
      %248 = sbr.rel (0) target = $region51
    $region50: #{tpu_custom_call.1} parent=1 // pred_region
      %250 = dma.done [#allocation8], 1024
    $region51: #{tpu_custom_call.1} parent=1 // pred_fallthru
      _
    // Predicated region
    $region52: #{tpu_custom_call.1} parent=1 // pred_check
      _
    $region53: #{tpu_custom_call.1} parent=1 // pred_check_branch
      %252 = sbr.rel (0) target = $region55
    $region54: #{tpu_custom_call.1} parent=1 // pred_region
      %254 = dma.done [#allocation13], 1024
    $region55: #{tpu_custom_call.1} parent=1 // pred_fallthru
      _
    %255 = vsyncpa [#allocation7], 1
    %256 = vsyncpa [#allocation10], 1
    %257 = vsyncpa [#allocation8], 1
    %258 = vsyncpa [#allocation13], 1

</llo_original>
